<compile_context>
chip_gen: v6e
topology: v6e:2x2x1
jax: 0.10.0
libtpu: 0.0.40
codegen_flags: <defaults>
</compile_context>

<pallas_src>
import jax
import jax.numpy as jnp
import numpy as np
from jax.experimental import pallas as pl
from jax.experimental.pallas import tpu as pltpu

# Batch tile on the lane axis.  (D0, TILE_B) + (out, TILE_B) f32/bf16 blocks are
# a few tens of KiB -> far below scoped-VMEM limits on v5e/v6e (128 MiB) and
# v7x (64 MiB), so one size works across generations.
TILE_B = 128


def _make_kernel(num_layers):
    """Build a whole-network forward kernel for `num_layers` Linear layers.

    Refs: (x_ref, w0, b0, w1, b1, ..., o_ref); activations are (features, TILE_B).
    """

    def kernel(*refs):
        x_ref, *wb_refs, o_ref = refs
        h = x_ref[...].astype(jnp.bfloat16)          # (D0, TILE_B), bf16 MXU operand
        for l in range(num_layers):
            w_ref = wb_refs[2 * l]                   # (out_l, in_l), bf16, resident
            b_ref = wb_refs[2 * l + 1]               # (out_l, 1),    f32,  resident
            a = jnp.dot(w_ref[...], h,
                        preferred_element_type=jnp.float32) + b_ref[...]
            if l < num_layers - 1:
                a = a * jax.nn.sigmoid(a)            # SiLU in f32 (EUP), all gens
                h = a.astype(jnp.bfloat16)           # bf16 operand for next MXU pass
            else:
                h = a                                # last layer: no activation
        o_ref[...] = h.astype(o_ref.dtype)           # (out_dim, TILE_B), lane-dense

    return kernel


def prepare_params(params, in_perm, out_perm):
    """One-time parameter prep (call at init, NOT per forward).

    Folds the in_perm gather into W0's columns and the out_perm_inv gather into
    the last layer's rows/bias, keeps weights in PyTorch (out, in) layout
    (no transpose needed for the lane-dense kernel), reshapes biases to
    (out, 1), and casts matmul operands to bf16.
    """
    n = len(params)
    w_first, _ = params[0]
    w_last, b_last = params[-1]
    d0 = w_first.shape[1]
    out_dim = w_last.shape[0]

    in_perm_i = in_perm.astype(jnp.int32)
    out_perm_i = out_perm.astype(jnp.int32)
    in_perm_inv = jnp.zeros(d0, jnp.int32).at[in_perm_i].set(
        jnp.arange(d0, dtype=jnp.int32))
    out_perm_inv = jnp.zeros(out_dim, jnp.int32).at[out_perm_i].set(
        jnp.arange(out_dim, dtype=jnp.int32))

    prepped = []
    for i, (w, b) in enumerate(params):
        w = w.astype(jnp.float32)
        b = b.astype(jnp.float32)
        if i == 0:
            # x[:, in_perm] @ W0.T  ==  x @ W0[:, in_perm_inv].T
            w = w[:, in_perm_inv]
        if i == n - 1:
            # y[:, out_perm_inv]  ==  (W_last[out_perm_inv] @ h + b[out_perm_inv])
            w = w[out_perm_inv, :]
            b = b[out_perm_inv]
        prepped.append(w.astype(jnp.bfloat16))
        prepped.append(b.reshape(-1, 1).astype(jnp.float32))
    return tuple(prepped)


def bio_mlp2d_forward(x, prepped, tile_b=TILE_B):
    """Forward pass.  `prepped` comes from prepare_params (weights already
    permuted / bf16 / (out,in) layout; biases (out,1) f32)."""
    B = x.shape[0]
    x2 = x.reshape(B, -1).astype(jnp.float32)
    D0 = x2.shape[1]
    num_layers = len(prepped) // 2
    out_dim = prepped[2 * (num_layers - 1)].shape[0]

    # Layout plumbing: batch -> lane axis (lane-dense blocks), pad B to tile.
    Bp = tile_b * pl.cdiv(B, tile_b)
    xT = jnp.transpose(x2).astype(jnp.bfloat16)      # (D0, B)
    if Bp != B:
        xT = jnp.pad(xT, ((0, 0), (0, Bp - B)))

    grid = (Bp // tile_b,)

    in_specs = [pl.BlockSpec((D0, tile_b), lambda i: (0, i))]
    args = [xT]
    flops = 0
    transcendentals = 0
    for l in range(num_layers):
        w, b = prepped[2 * l], prepped[2 * l + 1]
        in_specs.append(pl.BlockSpec(w.shape, lambda i: (0, 0)))   # resident
        in_specs.append(pl.BlockSpec(b.shape, lambda i: (0, 0)))   # resident
        args.append(w)
        args.append(b)
        flops += 2 * Bp * w.shape[0] * w.shape[1]
        if l < num_layers - 1:
            transcendentals += Bp * w.shape[0]       # one sigmoid per element
    bytes_accessed = (sum(int(a.size) * a.dtype.itemsize for a in args)
                      + out_dim * Bp * 4)

    out = pl.pallas_call(
        _make_kernel(num_layers),
        out_shape=jax.ShapeDtypeStruct((out_dim, Bp), jnp.float32),
        grid=grid,
        in_specs=in_specs,
        out_specs=pl.BlockSpec((out_dim, tile_b), lambda i: (0, i)),
        compiler_params=pltpu.CompilerParams(
            dimension_semantics=("parallel",)),      # megacore on v7x; no-op v5e/v6e
        cost_estimate=pl.CostEstimate(
            flops=flops,
            transcendentals=transcendentals,
            bytes_accessed=bytes_accessed),
    )(*args)

    return jnp.transpose(out[:, :B])                 # (B, out_dim)


def init_params(key, shp):
    """Deterministic nn.Linear-style init: U(-1/sqrt(in), 1/sqrt(in))."""
    params = []
    for i in range(len(shp) - 1):
        in_d, out_d = shp[i], shp[i + 1]
        key, kw, kb = jax.random.split(key, 3)
        bound = 1.0 / np.sqrt(in_d)
        w = jax.random.uniform(kw, (out_d, in_d), jnp.float32, -bound, bound)
        b = jax.random.uniform(kb, (out_d,), jnp.float32, -bound, bound)
        params.append((w, b))
    return params


def reference_forward(x, params, in_perm, out_perm):
    """Pure-JAX f32 reference mirroring the PyTorch forward exactly."""
    B = x.shape[0]
    x = x.reshape(B, -1).astype(jnp.float32)
    D = x.shape[1]
    x = x.reshape(B, 1, D)[:, :, in_perm.astype(jnp.int32)].reshape(B, D)
    n = len(params)
    for i in range(n - 1):
        w, b = params[i]
        x = x @ w.T + b
        x = x * jax.nn.sigmoid(x)
    w, b = params[-1]
    x = x @ w.T + b
    out_dim = w.shape[0]
    out_perm_inv = jnp.zeros(out_dim, jnp.int32).at[out_perm.astype(jnp.int32)].set(
        jnp.arange(out_dim, dtype=jnp.int32))
    return x[:, out_perm_inv]


if __name__ == "__main__":
    # Small MNIST-like config: shp = [64, 32, 32, 16] (depth = 3 linear layers)
    shp = [64, 32, 32, 16]
    key = jax.random.PRNGKey(0)
    key, kx, kpi, kpo = jax.random.split(key, 4)

    # NCHW-style input (B, 1, 8, 8) -> flattened to 64 features.
    B = 256
    x = jax.random.normal(kx, (B, 1, 8, 8), dtype=jnp.float32)

    params = init_params(key, shp)

    # The module initializes the permutations as arange; use non-trivial
    # permutations here (a valid post-`swap` state) to exercise the folded
    # in_perm / out_perm_inv paths.  Stored as float like the nn.Parameter.
    in_perm = jax.random.permutation(kpi, shp[0]).astype(jnp.float32)
    out_perm = jax.random.permutation(kpo, shp[-1]).astype(jnp.float32)

    # One-time prep (fold perms into weights, bf16 cast, bias reshape).
    prepped = prepare_params(params, in_perm, out_perm)

    fwd = jax.jit(bio_mlp2d_forward)
    out = fwd(x, prepped)
    out = jax.block_until_ready(out)

    ref = reference_forward(x, params, in_perm, out_perm)
    np.testing.assert_allclose(np.asarray(out), np.asarray(ref),
                               rtol=2e-2, atol=2e-2)

    # TODO(synk): get_cc / swap / relocate / get_top_id are training-time
    # graph-rewiring utilities, not part of the forward pass; not ported.
    print("KERNEL_OK")
</pallas_src>

<mosaic_0001>
module attributes {stable_mosaic.version = 11 : i64} {
  func.func @kernel(%arg0: i32, %arg1: memref<64x128xbf16, #tpu.memory_space<vmem>>, %arg2: memref<32x64xbf16, #tpu.memory_space<vmem>>, %arg3: memref<32x1xf32, #tpu.memory_space<vmem>>, %arg4: memref<32x32xbf16, #tpu.memory_space<vmem>>, %arg5: memref<32x1xf32, #tpu.memory_space<vmem>>, %arg6: memref<16x32xbf16, #tpu.memory_space<vmem>>, %arg7: memref<16x1xf32, #tpu.memory_space<vmem>>, %arg8: memref<16x128xf32, #tpu.memory_space<vmem>>) attributes {dimension_semantics = [#tpu.dimension_semantics<parallel>], iteration_bounds = array<i64: 2>, scalar_prefetch = 0 : i64, scratch_operands = 0 : i64, tpu.core_type = #tpu.core_type<tc>, window_params = [{transform_indices = @transform_0, window_bounds = array<i64: 64, 128>}, {pipeline_mode = #tpu.pipeline_mode<synchronous>, transform_indices = @transform_1, window_bounds = array<i64: 32, 64>}, {pipeline_mode = #tpu.pipeline_mode<synchronous>, transform_indices = @transform_2, window_bounds = array<i64: 32, 1>}, {pipeline_mode = #tpu.pipeline_mode<synchronous>, transform_indices = @transform_3, window_bounds = array<i64: 32, 32>}, {pipeline_mode = #tpu.pipeline_mode<synchronous>, transform_indices = @transform_4, window_bounds = array<i64: 32, 1>}, {pipeline_mode = #tpu.pipeline_mode<synchronous>, transform_indices = @transform_5, window_bounds = array<i64: 16, 32>}, {pipeline_mode = #tpu.pipeline_mode<synchronous>, transform_indices = @transform_6, window_bounds = array<i64: 16, 1>}, {transform_indices = @transform_7, window_bounds = array<i64: 16, 128>}]} {
    %c0 = arith.constant 0 : index
    %c0_0 = arith.constant 0 : index
    %0 = vector.load %arg1[%c0, %c0_0] : memref<64x128xbf16, #tpu.memory_space<vmem>>, vector<64x128xbf16>
    %c0_1 = arith.constant 0 : index
    %c0_2 = arith.constant 0 : index
    %1 = vector.load %arg2[%c0_1, %c0_2] : memref<32x64xbf16, #tpu.memory_space<vmem>>, vector<32x64xbf16>
    %cst = arith.constant dense<0.000000e+00> : vector<32x128xf32>
    %2 = tpu.matmul %1, %0, %cst {dimension_numbers = #tpu.dot_dimension_numbers<[1], [0], [0], [1], [0, 0, 1, 1], [], []>} : vector<32x64xbf16>, vector<64x128xbf16>, vector<32x128xf32> -> vector<32x128xf32>
    %c0_3 = arith.constant 0 : index
    %c0_4 = arith.constant 0 : index
    %3 = vector.load %arg3[%c0_3, %c0_4] : memref<32x1xf32, #tpu.memory_space<vmem>>, vector<32x1xf32>
    %4 = vector.broadcast %3 : vector<32x1xf32> to vector<32x128xf32>
    %5 = arith.addf %2, %4 : vector<32x128xf32>
    %6 = arith.negf %5 : vector<32x128xf32>
    %7 = math.exp %6 : vector<32x128xf32>
    %cst_5 = arith.constant 1.000000e+00 : f32
    %8 = vector.broadcast %cst_5 : f32 to vector<32x128xf32>
    %9 = arith.addf %8, %7 : vector<32x128xf32>
    %10 = arith.divf %8, %9 : vector<32x128xf32>
    %11 = arith.mulf %5, %10 : vector<32x128xf32>
    %12 = arith.truncf %11 : vector<32x128xf32> to vector<32x128xbf16>
    %c0_6 = arith.constant 0 : index
    %c0_7 = arith.constant 0 : index
    %13 = vector.load %arg4[%c0_6, %c0_7] : memref<32x32xbf16, #tpu.memory_space<vmem>>, vector<32x32xbf16>
    %cst_8 = arith.constant dense<0.000000e+00> : vector<32x128xf32>
    %14 = tpu.matmul %13, %12, %cst_8 {dimension_numbers = #tpu.dot_dimension_numbers<[1], [0], [0], [1], [0, 0, 1, 1], [], []>} : vector<32x32xbf16>, vector<32x128xbf16>, vector<32x128xf32> -> vector<32x128xf32>
    %c0_9 = arith.constant 0 : index
    %c0_10 = arith.constant 0 : index
    %15 = vector.load %arg5[%c0_9, %c0_10] : memref<32x1xf32, #tpu.memory_space<vmem>>, vector<32x1xf32>
    %16 = vector.broadcast %15 : vector<32x1xf32> to vector<32x128xf32>
    %17 = arith.addf %14, %16 : vector<32x128xf32>
    %18 = arith.negf %17 : vector<32x128xf32>
    %19 = math.exp %18 : vector<32x128xf32>
    %cst_11 = arith.constant 1.000000e+00 : f32
    %20 = vector.broadcast %cst_11 : f32 to vector<32x128xf32>
    %21 = arith.addf %20, %19 : vector<32x128xf32>
    %22 = arith.divf %20, %21 : vector<32x128xf32>
    %23 = arith.mulf %17, %22 : vector<32x128xf32>
    %24 = arith.truncf %23 : vector<32x128xf32> to vector<32x128xbf16>
    %c0_12 = arith.constant 0 : index
    %c0_13 = arith.constant 0 : index
    %25 = vector.load %arg6[%c0_12, %c0_13] : memref<16x32xbf16, #tpu.memory_space<vmem>>, vector<16x32xbf16>
    %cst_14 = arith.constant dense<0.000000e+00> : vector<16x128xf32>
    %26 = tpu.matmul %25, %24, %cst_14 {dimension_numbers = #tpu.dot_dimension_numbers<[1], [0], [0], [1], [0, 0, 1, 1], [], []>} : vector<16x32xbf16>, vector<32x128xbf16>, vector<16x128xf32> -> vector<16x128xf32>
    %c0_15 = arith.constant 0 : index
    %c0_16 = arith.constant 0 : index
    %27 = vector.load %arg7[%c0_15, %c0_16] : memref<16x1xf32, #tpu.memory_space<vmem>>, vector<16x1xf32>
    %28 = vector.broadcast %27 : vector<16x1xf32> to vector<16x128xf32>
    %29 = arith.addf %26, %28 : vector<16x128xf32>
    %c0_17 = arith.constant 0 : index
    %c0_18 = arith.constant 0 : index
    %30 = vector.load %arg8[%c0_17, %c0_18] : memref<16x128xf32, #tpu.memory_space<vmem>>, vector<16x128xf32>
    tpu.vector_store %arg8[%c0_17, %c0_18], %29 {strides = array<i32>} : memref<16x128xf32, #tpu.memory_space<vmem>>, vector<16x128xf32>,
    return
  }
  func.func @transform_0(%arg0: i32) -> (i32, i32) {
    %c0_i32 = arith.constant 0 : i32
    %c0_i32_0 = arith.constant 0 : i32
    return %c0_i32, %arg0 : i32, i32
  }
  func.func @transform_1(%arg0: i32) -> (i32, i32) {
    %c0_i32 = arith.constant 0 : i32
    %c0_i32_0 = arith.constant 0 : i32
    %c0_i32_1 = arith.constant 0 : i32
    return %c0_i32, %c0_i32_0 : i32, i32
  }
  func.func @transform_2(%arg0: i32) -> (i32, i32) {
    %c0_i32 = arith.constant 0 : i32
    %c0_i32_0 = arith.constant 0 : i32
    %c0_i32_1 = arith.constant 0 : i32
    return %c0_i32, %c0_i32_0 : i32, i32
  }
  func.func @transform_3(%arg0: i32) -> (i32, i32) {
    %c0_i32 = arith.constant 0 : i32
    %c0_i32_0 = arith.constant 0 : i32
    %c0_i32_1 = arith.constant 0 : i32
    return %c0_i32, %c0_i32_0 : i32, i32
  }
  func.func @transform_4(%arg0: i32) -> (i32, i32) {
    %c0_i32 = arith.constant 0 : i32
    %c0_i32_0 = arith.constant 0 : i32
    %c0_i32_1 = arith.constant 0 : i32
    return %c0_i32, %c0_i32_0 : i32, i32
  }
  func.func @transform_5(%arg0: i32) -> (i32, i32) {
    %c0_i32 = arith.constant 0 : i32
    %c0_i32_0 = arith.constant 0 : i32
    %c0_i32_1 = arith.constant 0 : i32
    return %c0_i32, %c0_i32_0 : i32, i32
  }
  func.func @transform_6(%arg0: i32) -> (i32, i32) {
    %c0_i32 = arith.constant 0 : i32
    %c0_i32_0 = arith.constant 0 : i32
    %c0_i32_1 = arith.constant 0 : i32
    return %c0_i32, %c0_i32_0 : i32, i32
  }
  func.func @transform_7(%arg0: i32) -> (i32, i32) {
    %c0_i32 = arith.constant 0 : i32
    %c0_i32_0 = arith.constant 0 : i32
    return %c0_i32, %arg0 : i32, i32
  }
}

</mosaic_0001>

<llo_original>
// kernel: bio_mlp2d_forward.1
$region0: #{bio_mlp2d_forward.1}
  #allocation0 [shape = 'u32[]', space=smem, size = 0x4, offset = 0x4, fixed_abs, tag = 'smem constant byte address 0x4 - core index']
  #allocation1 [shape = 'u32[144,128]{1,0:T(1,128)}', space=vmem, size = 0x12000, scoped, tag = 'internal scratch']
  %s0 = inlined_call_operand.vmem [shape: bf16[64,256], index: 0, kind: input, shape index: {}]
  %s1 = inlined_call_operand.vmem [shape: bf16[32,64], index: 1, kind: input, shape index: {}]
  %s2 = inlined_call_operand.vmem [shape: f32[32,1], index: 2, kind: input, shape index: {}]
  %s3 = inlined_call_operand.vmem [shape: bf16[32,32], index: 3, kind: input, shape index: {}]
  %s4 = inlined_call_operand.vmem [shape: f32[32,1], index: 4, kind: input, shape index: {}]
  %s5 = inlined_call_operand.vmem [shape: bf16[16,32], index: 5, kind: input, shape index: {}]
  %s6 = inlined_call_operand.vmem [shape: f32[16,1], index: 6, kind: input, shape index: {}]
  %s7 = inlined_call_operand.hbm [shape: f32[16,256], index: 7, kind: output, shape index: {}]
  %s8 = sld [smem:[#allocation0]]
  $region102: #{bio_mlp2d_forward.1} parent=0
    _
  %s10 = ssub.s32 1, %s8
  %s11 = scalar_select 0, %s10, %s8
  $region1: #{bio_mlp2d_forward.1} parent=0
    #allocation2 [shape = 'u8[32768]{0}', space=vmem, size = 0x8000, scoped, tag = 'input window, operand 0']
    #allocation3 [shape = 'u8[16384]{0}', space=vmem, size = 0x4000, scoped, tag = 'output window, operand 0']
    #allocation4 [shape = 's32[2]{0}', space=sflag, size = 0x8, scoped, tag = 'scoped memory for bio_mlp2d_forward.1']
    %12 = vsyncpa [#allocation4], 0
    %s13 = scalar_lea.sflag [#allocation4], 1
    %14 = vsyncpa %s13, 0
    loop: start=0, step=1, limit=4
    $region2: #{bio_mlp2d_forward.1} parent=1 // loop_pre_header
      _
    $region3: #{bio_mlp2d_forward.1} parent=1 // loop_header
      %s16 = sphi 0, %s20
      %p17 = scmp.ge.s32.totalorder %s16, 4
      %s26 = sphi 0, %s28
      %s29 = sphi 0, %s26
      %s30 = sphi 0, %s29
      %s46 = sphi 0, %s30
      %s50 = sphi 0, %s50
      %s52 = sphi 0, %s50
      %s53 = sphi 0, %s52
      %s67 = sphi 0, %s53
      %s71 = sphi 0, %s71
      %s73 = sphi 0, %s71
      %s74 = sphi 0, %s73
      %s88 = sphi 0, %s74
      %s92 = sphi 0, %s92
      %s94 = sphi 0, %s92
      %s95 = sphi 0, %s94
      %s109 = sphi 0, %s95
      %s113 = sphi 0, %s113
      %s115 = sphi 0, %s113
      %s116 = sphi 0, %s115
      %s130 = sphi 0, %s116
      %s134 = sphi 0, %s134
      %s136 = sphi 0, %s134
      %s137 = sphi 0, %s136
      %s151 = sphi 0, %s137
      %s155 = sphi 0, %s155
      %s157 = sphi 0, %s155
      %s158 = sphi 0, %s157
      %s172 = sphi 0, %s158
      %s178 = sphi 0, %s180
      %s181 = sphi 0, %s178
      %s182 = sphi 0, %s181
      %s198 = sphi 0, %s182
    $region4: #{bio_mlp2d_forward.1} parent=1 // loop_header_branch
      %19 = sbr.rel (%p17) target = $region8
    $region5: #{bio_mlp2d_forward.1} parent=1 // loop_body
      %s21 = ssub.s32 %s16, 1
      %s22 = ssub.s32 %s16, 2
      %s23 = sadd.s32 %s16, 1
      %s24 = ssub.s32 %s16, %s23
      %p25 = scmp.eq.s32.totalorder %s24, 0
      %s27 = sadd.s32 %s26, 1
      %s28 = scalar_select %p25, %s26, %s27
      %p31 = pneg %p25
      %p32 = scmp.eq.s32.totalorder %s16, 1
      %p33 = por %p31, %p32
      %p34 = scmp.ne.s32.totalorder %s26, %s29
      %p35 = scmp.eq.s32.totalorder %s16, 0
      %p36 = por %p34, %p35
      %p37 = scmp.ne.s32.totalorder %s26, %s29
      %p38 = scmp.eq.s32.totalorder %s21, 1
      %p39 = por %p37, %p38
      %p40 = scmp.ne.s32.totalorder %s29, %s30
      %p41 = scmp.eq.s32.totalorder %s21, 0
      %p42 = por %p40, %p41
      %p43 = scmp.ne.s32.totalorder %s29, %s30
      %p44 = scmp.eq.s32.totalorder %s22, 1
      %p45 = por %p43, %p44
      %p47 = scmp.ne.s32.totalorder %s30, %s46
      %p48 = scmp.eq.s32.totalorder %s22, 0
      %p49 = por %p47, %p48
      %s51 = sadd.s32 %s50, 1
      %p54 = scmp.eq.s32.totalorder %s16, 1
      %p55 = scmp.ne.s32.totalorder %s50, %s52
      %p56 = scmp.eq.s32.totalorder %s16, 0
      %p57 = por %p55, %p56
      %p58 = scmp.ne.s32.totalorder %s50, %s52
      %p59 = scmp.eq.s32.totalorder %s21, 1
      %p60 = por %p58, %p59
      %p61 = scmp.ne.s32.totalorder %s52, %s53
      %p62 = scmp.eq.s32.totalorder %s21, 0
      %p63 = por %p61, %p62
      %p64 = scmp.ne.s32.totalorder %s52, %s53
      %p65 = scmp.eq.s32.totalorder %s22, 1
      %p66 = por %p64, %p65
      %p68 = scmp.ne.s32.totalorder %s53, %s67
      %p69 = scmp.eq.s32.totalorder %s22, 0
      %p70 = por %p68, %p69
      %s72 = sadd.s32 %s71, 1
      %p75 = scmp.eq.s32.totalorder %s16, 1
      %p76 = scmp.ne.s32.totalorder %s71, %s73
      %p77 = scmp.eq.s32.totalorder %s16, 0
      %p78 = por %p76, %p77
      %p79 = scmp.ne.s32.totalorder %s71, %s73
      %p80 = scmp.eq.s32.totalorder %s21, 1
      %p81 = por %p79, %p80
      %p82 = scmp.ne.s32.totalorder %s73, %s74
      %p83 = scmp.eq.s32.totalorder %s21, 0
      %p84 = por %p82, %p83
      %p85 = scmp.ne.s32.totalorder %s73, %s74
      %p86 = scmp.eq.s32.totalorder %s22, 1
      %p87 = por %p85, %p86
      %p89 = scmp.ne.s32.totalorder %s74, %s88
      %p90 = scmp.eq.s32.totalorder %s22, 0
      %p91 = por %p89, %p90
      %s93 = sadd.s32 %s92, 1
      %p96 = scmp.eq.s32.totalorder %s16, 1
      %p97 = scmp.ne.s32.totalorder %s92, %s94
      %p98 = scmp.eq.s32.totalorder %s16, 0
      %p99 = por %p97, %p98
      %p100 = scmp.ne.s32.totalorder %s92, %s94
      %p101 = scmp.eq.s32.totalorder %s21, 1
      %p102 = por %p100, %p101
      %p103 = scmp.ne.s32.totalorder %s94, %s95
      %p104 = scmp.eq.s32.totalorder %s21, 0
      %p105 = por %p103, %p104
      %p106 = scmp.ne.s32.totalorder %s94, %s95
      %p107 = scmp.eq.s32.totalorder %s22, 1
      %p108 = por %p106, %p107
      %p110 = scmp.ne.s32.totalorder %s95, %s109
      %p111 = scmp.eq.s32.totalorder %s22, 0
      %p112 = por %p110, %p111
      %s114 = sadd.s32 %s113, 1
      %p117 = scmp.eq.s32.totalorder %s16, 1
      %p118 = scmp.ne.s32.totalorder %s113, %s115
      %p119 = scmp.eq.s32.totalorder %s16, 0
      %p120 = por %p118, %p119
      %p121 = scmp.ne.s32.totalorder %s113, %s115
      %p122 = scmp.eq.s32.totalorder %s21, 1
      %p123 = por %p121, %p122
      %p124 = scmp.ne.s32.totalorder %s115, %s116
      %p125 = scmp.eq.s32.totalorder %s21, 0
      %p126 = por %p124, %p125
      %p127 = scmp.ne.s32.totalorder %s115, %s116
      %p128 = scmp.eq.s32.totalorder %s22, 1
      %p129 = por %p127, %p128
      %p131 = scmp.ne.s32.totalorder %s116, %s130
      %p132 = scmp.eq.s32.totalorder %s22, 0
      %p133 = por %p131, %p132
      %s135 = sadd.s32 %s134, 1
      %p138 = scmp.eq.s32.totalorder %s16, 1
      %p139 = scmp.ne.s32.totalorder %s134, %s136
      %p140 = scmp.eq.s32.totalorder %s16, 0
      %p141 = por %p139, %p140
      %p142 = scmp.ne.s32.totalorder %s134, %s136
      %p143 = scmp.eq.s32.totalorder %s21, 1
      %p144 = por %p142, %p143
      %p145 = scmp.ne.s32.totalorder %s136, %s137
      %p146 = scmp.eq.s32.totalorder %s21, 0
      %p147 = por %p145, %p146
      %p148 = scmp.ne.s32.totalorder %s136, %s137
      %p149 = scmp.eq.s32.totalorder %s22, 1
      %p150 = por %p148, %p149
      %p152 = scmp.ne.s32.totalorder %s137, %s151
      %p153 = scmp.eq.s32.totalorder %s22, 0
      %p154 = por %p152, %p153
      %s156 = sadd.s32 %s155, 1
      %p159 = scmp.eq.s32.totalorder %s16, 1
      %p160 = scmp.ne.s32.totalorder %s155, %s157
      %p161 = scmp.eq.s32.totalorder %s16, 0
      %p162 = por %p160, %p161
      %p163 = scmp.ne.s32.totalorder %s155, %s157
      %p164 = scmp.eq.s32.totalorder %s21, 1
      %p165 = por %p163, %p164
      %p166 = scmp.ne.s32.totalorder %s157, %s158
      %p167 = scmp.eq.s32.totalorder %s21, 0
      %p168 = por %p166, %p167
      %p169 = scmp.ne.s32.totalorder %s157, %s158
      %p170 = scmp.eq.s32.totalorder %s22, 1
      %p171 = por %p169, %p170
      %p173 = scmp.ne.s32.totalorder %s158, %s172
      %p174 = scmp.eq.s32.totalorder %s22, 0
      %p175 = por %p173, %p174
      %s176 = ssub.s32 %s16, %s23
      %p177 = scmp.eq.s32.totalorder %s176, 0
      %s179 = sadd.s32 %s178, 1
      %s180 = scalar_select %p177, %s178, %s179
      %p183 = pneg %p177
      %p184 = scmp.eq.s32.totalorder %s16, 1
      %p185 = por %p183, %p184
      %p186 = scmp.ne.s32.totalorder %s178, %s181
      %p187 = scmp.eq.s32.totalorder %s16, 0
      %p188 = por %p186, %p187
      %p189 = scmp.ne.s32.totalorder %s178, %s181
      %p190 = scmp.eq.s32.totalorder %s21, 1
      %p191 = por %p189, %p190
      %p192 = scmp.ne.s32.totalorder %s181, %s182
      %p193 = scmp.eq.s32.totalorder %s21, 0
      %p194 = por %p192, %p193
      %p195 = scmp.ne.s32.totalorder %s181, %s182
      %p196 = scmp.eq.s32.totalorder %s22, 1
      %p197 = por %p195, %p196
      %p199 = scmp.ne.s32.totalorder %s182, %s198
      %p200 = scmp.eq.s32.totalorder %s22, 0
      %p201 = por %p199, %p200
      %p202 = scmp.le.s32.totalorder 1, %s16
      %p203 = scmp.lt.s32.totalorder %s16, 3
      %p204 = pnand %p202, %p203
      %p205 = pneg %p204
      // Predicated region
      $region9: #{bio_mlp2d_forward.1} parent=5 // pred_check
        _
      $region10: #{bio_mlp2d_forward.1} parent=5 // pred_check_branch
        %207 = sbr.rel (%p204) target = $region12
      $region11: #{bio_mlp2d_forward.1} parent=5 // pred_region
        %s208 = ssub.s32 %s16, 1
        // Predicated region
        $region13: #{bio_mlp2d_forward.1} parent=11 // pred_check
          %p209 = pneg %p63
        $region14: #{bio_mlp2d_forward.1} parent=11 // pred_check_branch
          %211 = sbr.rel (%p209) target = $region16
        $region15: #{bio_mlp2d_forward.1} parent=11 // pred_region
          _
        $region16: #{bio_mlp2d_forward.1} parent=11 // pred_fallthru
          _
        // Predicated region
        $region17: #{bio_mlp2d_forward.1} parent=11 // pred_check
          %p212 = pneg %p84
        $region18: #{bio_mlp2d_forward.1} parent=11 // pred_check_branch
          %214 = sbr.rel (%p212) target = $region20
        $region19: #{bio_mlp2d_forward.1} parent=11 // pred_region
          _
        $region20: #{bio_mlp2d_forward.1} parent=11 // pred_fallthru
          _
        // Predicated region
        $region21: #{bio_mlp2d_forward.1} parent=11 // pred_check
          %p215 = pneg %p105
        $region22: #{bio_mlp2d_forward.1} parent=11 // pred_check_branch
          %217 = sbr.rel (%p215) target = $region24
        $region23: #{bio_mlp2d_forward.1} parent=11 // pred_region
          _
        $region24: #{bio_mlp2d_forward.1} parent=11 // pred_fallthru
          _
        // Predicated region
        $region25: #{bio_mlp2d_forward.1} parent=11 // pred_check
          %p218 = pneg %p126
        $region26: #{bio_mlp2d_forward.1} parent=11 // pred_check_branch
          %220 = sbr.rel (%p218) target = $region28
        $region27: #{bio_mlp2d_forward.1} parent=11 // pred_region
          _
        $region28: #{bio_mlp2d_forward.1} parent=11 // pred_fallthru
          _
        // Predicated region
        $region29: #{bio_mlp2d_forward.1} parent=11 // pred_check
          %p221 = pneg %p147
        $region30: #{bio_mlp2d_forward.1} parent=11 // pred_check_branch
          %223 = sbr.rel (%p221) target = $region32
        $region31: #{bio_mlp2d_forward.1} parent=11 // pred_region
          _
        $region32: #{bio_mlp2d_forward.1} parent=11 // pred_fallthru
          _
        // Predicated region
        $region33: #{bio_mlp2d_forward.1} parent=11 // pred_check
          %p224 = pneg %p168
        $region34: #{bio_mlp2d_forward.1} parent=11 // pred_check_branch
          %226 = sbr.rel (%p224) target = $region36
        $region35: #{bio_mlp2d_forward.1} parent=11 // pred_region
          _
        $region36: #{bio_mlp2d_forward.1} parent=11 // pred_fallthru
          _
      $region12: #{bio_mlp2d_forward.1} parent=5 // pred_fallthru
        _
      %p227 = scmp.lt.s32.totalorder %s16, 2
      // Predicated region
      $region37: #{bio_mlp2d_forward.1} parent=5 // pred_check
        %p228 = pneg %p227
      $region38: #{bio_mlp2d_forward.1} parent=5 // pred_check_branch
        %230 = sbr.rel (%p228) target = $region40
      $region39: #{bio_mlp2d_forward.1} parent=5 // pred_region
        // Predicated region
        $region41: #{bio_mlp2d_forward.1} parent=39 // pred_check
          %p231 = pneg %p36
        $region42: #{bio_mlp2d_forward.1} parent=39 // pred_check_branch
          %233 = sbr.rel (%p231) target = $region44
        $region43: #{bio_mlp2d_forward.1} parent=39 // pred_region
          %s234 = sand.u32 %s26, 1
          %s235 = sand.u32 %s26, 1
          %s236 = smul.addr %s235, 32
          %s237 = scalar_lea.vmem [#allocation2], %s236
          %s238 = smul.addr %s16, 4
          %s239 = scalar_lea.vmem %s0, %s238
          // Predicated region
          $region45: #{bio_mlp2d_forward.1} parent=43 // pred_check
            _
          $region46: #{bio_mlp2d_forward.1} parent=43 // pred_check_branch
            %241 = sbr.rel (0) target = $region48
          $region47: #{bio_mlp2d_forward.1} parent=43 // pred_region
            // Predicated region
            $region49: #{bio_mlp2d_forward.1} parent=47 // pred_check
              _
            $region50: #{bio_mlp2d_forward.1} parent=47 // pred_check_branch
              %243 = sbr.rel target = $region52
            $region51: #{bio_mlp2d_forward.1} parent=47 // pred_region
              // Predicated region
              $region64: #{bio_mlp2d_forward.1} parent=51 // pred_check
                _
              $region65: #{bio_mlp2d_forward.1} parent=51 // pred_check_branch
                %273 = sbr.rel (0) target = $region67
              $region66: #{bio_mlp2d_forward.1} parent=51 // pred_region
                loop: start=0, step=1, limit=1
                $region68: #{bio_mlp2d_forward.1} parent=66 // loop_pre_header
                  _
                $region69: #{bio_mlp2d_forward.1} parent=66 // loop_header
                  %s275 = sphi 0, %s279
                  %p276 = scmp.ge.s32.totalorder %s275, 1
                  %s280 = sphi %s239, %s239
                  %s281 = sphi %s237, %s237
                $region70: #{bio_mlp2d_forward.1} parent=66 // loop_header_branch
                  %278 = sbr.rel (%p276) target = $region74
                $region71: #{bio_mlp2d_forward.1} parent=66 // loop_body
                  _
                $region72: #{bio_mlp2d_forward.1} parent=66 // loop_footer
                  %s279 = sadd.s32 1, %s275
                $region73: #{bio_mlp2d_forward.1} parent=66 // loop_footer_branch
                  %274 = sbr.rel target = $region69
                $region74: #{bio_mlp2d_forward.1} parent=66 // loop_exit
                  _
                %s283 = ssub.s32 16, 1
                loop: start=0, step=1, limit=1
                $region75: #{bio_mlp2d_forward.1} parent=66 // loop_pre_header
                  _
                $region76: #{bio_mlp2d_forward.1} parent=66 // loop_header
                  %s285 = sphi 0, %s289
                  %p286 = scmp.ge.s32.totalorder %s285, 1
                  %s290 = sphi %s239, %s239
                  %s291 = sphi %s237, %s237
                $region77: #{bio_mlp2d_forward.1} parent=66 // loop_header_branch
                  %288 = sbr.rel (%p286) target = $region81
                $region78: #{bio_mlp2d_forward.1} parent=66 // loop_body
                  %v292 = vld [vmem:[%s290] sm:%s283]
                  %293 = vst [vmem:[%s291] sm:%s283] %v292
                  %v294 = vld [vmem:[%s290 + $0x8] sm:%s283]
                  %295 = vst [vmem:[%s291 + $0x4] sm:%s283] %v294
                  %v296 = vld [vmem:[%s290 + $0x10] sm:%s283]
                  %297 = vst [vmem:[%s291 + $0x8] sm:%s283] %v296
                  %v298 = vld [vmem:[%s290 + $0x18] sm:%s283]
                  %299 = vst [vmem:[%s291 + $0xc] sm:%s283] %v298
                  %v300 = vld [vmem:[%s290 + $0x20] sm:%s283]
                  %301 = vst [vmem:[%s291 + $0x10] sm:%s283] %v300
                  %v302 = vld [vmem:[%s290 + $0x28] sm:%s283]
                  %303 = vst [vmem:[%s291 + $0x14] sm:%s283] %v302
                  %v304 = vld [vmem:[%s290 + $0x30] sm:%s283]
                  %305 = vst [vmem:[%s291 + $0x18] sm:%s283] %v304
                  %v306 = vld [vmem:[%s290 + $0x38] sm:%s283]
                  %307 = vst [vmem:[%s291 + $0x1c] sm:%s283] %v306
                $region79: #{bio_mlp2d_forward.1} parent=66 // loop_footer
                  %s289 = sadd.s32 1, %s285
                $region80: #{bio_mlp2d_forward.1} parent=66 // loop_footer_branch
                  %284 = sbr.rel target = $region76
                $region81: #{bio_mlp2d_forward.1} parent=66 // loop_exit
                  _
              $region67: #{bio_mlp2d_forward.1} parent=51 // pred_fallthru
                _
            $region52: #{bio_mlp2d_forward.1} parent=47 // pred_fallthru
              _
            // Predicated region
            $region53: #{bio_mlp2d_forward.1} parent=47 // pred_check
              _
            $region54: #{bio_mlp2d_forward.1} parent=47 // pred_check_branch
              %245 = sbr.rel (0) target = $region56
            $region55: #{bio_mlp2d_forward.1} parent=47 // pred_region
              %s247 = ssub.s32 16, 1
              loop: start=0, step=1, limit=1
              $region57: #{bio_mlp2d_forward.1} parent=55 // loop_pre_header
                _
              $region58: #{bio_mlp2d_forward.1} parent=55 // loop_header
                %s249 = sphi 0, %s253
                %p250 = scmp.ge.s32.totalorder %s249, 1
                %s254 = sphi %s239, %s239
                %s255 = sphi %s237, %s237
              $region59: #{bio_mlp2d_forward.1} parent=55 // loop_header_branch
                %252 = sbr.rel (%p250) target = $region63
              $region60: #{bio_mlp2d_forward.1} parent=55 // loop_body
                %v256 = vld [vmem:[%s254] sm:%s247]
                %257 = vst [vmem:[%s255] sm:%s247] %v256
                %v258 = vld [vmem:[%s254 + $0x8] sm:%s247]
                %259 = vst [vmem:[%s255 + $0x4] sm:%s247] %v258
                %v260 = vld [vmem:[%s254 + $0x10] sm:%s247]
                %261 = vst [vmem:[%s255 + $0x8] sm:%s247] %v260
                %v262 = vld [vmem:[%s254 + $0x18] sm:%s247]
                %263 = vst [vmem:[%s255 + $0xc] sm:%s247] %v262
                %v264 = vld [vmem:[%s254 + $0x20] sm:%s247]
                %265 = vst [vmem:[%s255 + $0x10] sm:%s247] %v264
                %v266 = vld [vmem:[%s254 + $0x28] sm:%s247]
                %267 = vst [vmem:[%s255 + $0x14] sm:%s247] %v266
                %v268 = vld [vmem:[%s254 + $0x30] sm:%s247]
                %269 = vst [vmem:[%s255 + $0x18] sm:%s247] %v268
                %v270 = vld [vmem:[%s254 + $0x38] sm:%s247]
                %271 = vst [vmem:[%s255 + $0x1c] sm:%s247] %v270
              $region61: #{bio_mlp2d_forward.1} parent=55 // loop_footer
                %s253 = sadd.s32 1, %s249
              $region62: #{bio_mlp2d_forward.1} parent=55 // loop_footer_branch
                %248 = sbr.rel target = $region58
              $region63: #{bio_mlp2d_forward.1} parent=55 // loop_exit
                _
            $region56: #{bio_mlp2d_forward.1} parent=47 // pred_fallthru
              _
          $region48: #{bio_mlp2d_forward.1} parent=43 // pred_fallthru
            _
          %308 = vnop
        $region44: #{bio_mlp2d_forward.1} parent=39 // pred_fallthru
          _
      $region40: #{bio_mlp2d_forward.1} parent=5 // pred_fallthru
        _
      %p309 = scmp.le.s32.totalorder 1, %s16
      %p310 = scmp.lt.s32.totalorder %s16, 3
      %p311 = pnand %p309, %p310
      %p312 = pneg %p311
      // Predicated region
      $region82: #{bio_mlp2d_forward.1} parent=5 // pred_check
        _
      $region83: #{bio_mlp2d_forward.1} parent=5 // pred_check_branch
        %314 = sbr.rel (%p311) target = $region85
      $region84: #{bio_mlp2d_forward.1} parent=5 // pred_region
        %s315 = ssub.s32 %s16, 1
        %s316 = sand.u32 %s29, 1
        %s317 = sand.u32 %s29, 1
        %s318 = smul.addr %s317, 32
        %s319 = scalar_lea.vmem [#allocation2], %s318
        // Predicated region
        $region86: #{bio_mlp2d_forward.1} parent=84 // pred_check
          %p320 = pneg %p42
        $region87: #{bio_mlp2d_forward.1} parent=84 // pred_check_branch
          %322 = sbr.rel (%p320) target = $region89
        $region88: #{bio_mlp2d_forward.1} parent=84 // pred_region
          _
        $region89: #{bio_mlp2d_forward.1} parent=84 // pred_fallthru
          _
        %s323 = sand.u32 %s29, 1
        %s324 = sand.u32 %s29, 1
        %s325 = smul.addr %s324, 32
        %s326 = scalar_lea.vmem [#allocation2], %s325
        %p327 = pneg %p42
        %p328 = pneg %p39
        %p329 = pneg %p63
        %p330 = pneg %p60
        %p331 = pneg %p84
        %p332 = pneg %p81
        %p333 = pneg %p105
        %p334 = pneg %p102
        %p335 = pneg %p126
        %p336 = pneg %p123
        %p337 = pneg %p147
        %p338 = pneg %p144
        %p339 = pneg %p168
        %p340 = pneg %p165
        %p341 = pneg %p194
        %p342 = pneg %p191
        %s343 = sand.u32 %s181, 1
        %s344 = scalar_lea.sflag [#allocation4], %s343
        %s345 = sand.u32 %s181, 1
        %s346 = smul.addr %s345, 16
        %s347 = scalar_lea.vmem [#allocation3], %s346
        %v349 = vld [vmem:[%s319] sm:$0xf]
        %v350 = vld [vmem:[%s319 + $0x4] sm:$0xf]
        %v351 = vld [vmem:[%s319 + $0x8] sm:$0xf]
        %v352 = vld [vmem:[%s319 + $0xc] sm:$0xf]
        %v353 = vld [vmem:[%s319 + $0x10] sm:$0xf]
        %v354 = vld [vmem:[%s319 + $0x14] sm:$0xf]
        %v355 = vld [vmem:[%s319 + $0x18] sm:$0xf]
        %v356 = vld [vmem:[%s319 + $0x1c] sm:$0xf]
        %v357 = vld [vmem:[%s1] sm:$0xf]
        %v358 = vld [vmem:[%s1 + $0x4] sm:$0xf]
        %v359 = vld [vmem:[%s1 + $0x8] sm:$0xf]
        %v360 = vld [vmem:[%s1 + $0xc] sm:$0xf]
        %v361 = vld [vmem:[%s2] sm:$0xff]
        %v362 = vld [vmem:[%s2 + $0x8] sm:$0xff]
        %v363 = vld [vmem:[%s2 + $0x10] sm:$0xff]
        %v364 = vld [vmem:[%s2 + $0x18] sm:$0xff]
        %366 = vset.pattern.permute.xlu0 0
        %367 = vperm.xlu0 %366, %v361
        %v368 = vpop.permute.xlu0 %367
        %371 = vset.pattern.permute.xlu0 0
        %372 = vperm.xlu0 %371, %v362
        %v373 = vpop.permute.xlu0 %372
        %376 = vset.pattern.permute.xlu0 0
        %377 = vperm.xlu0 %376, %v363
        %v378 = vpop.permute.xlu0 %377
        %381 = vset.pattern.permute.xlu0 0
        %382 = vperm.xlu0 %381, %v364
        %v383 = vpop.permute.xlu0 %382
        %v389 = vunpack.c.l.b16 %v357
        %v390 = vunpack.c.l.b16 %v358
        %v391 = vunpack.c.l.b16 %v359
        %v392 = vunpack.c.l.b16 %v360
        %v393 = vpack.c.b16 %v390, %v389
        %v394 = vpack.c.b16 %v392, %v391
        %v403 = vunpack.c.l.b16 %v349
        %v404 = vunpack.c.l.b16 %v350
        %v405 = vunpack.c.l.b16 %v351
        %v406 = vunpack.c.l.b16 %v352
        %v407 = vunpack.c.l.b16 %v353
        %v408 = vunpack.c.l.b16 %v354
        %v409 = vunpack.c.l.b16 %v355
        %v410 = vunpack.c.l.b16 %v356
        %v411 = vpack.c.b16 %v404, %v403
        %v412 = vpack.c.b16 %v406, %v405
        %v413 = vpack.c.b16 %v408, %v407
        %v414 = vpack.c.b16 %v410, %v409
        %vm419 = vcmask 523264
        %v421 = vsel %vm419, %v393, 0
        %v424 = vsel %vm419, %v394, 0
        %426 = vmatprep.subr.bf16.mxu0 0
        %427 = vmatpush1.bf16.msra.mxu0 0
        %428 = vmatprep.subr.bf16.mxu0 0
        %429 = vmatpush1.bf16.msra.mxu0 0
        %430 = vmatprep.subr.bf16.mxu0 0
        %431 = vmatpush1.bf16.msra.mxu0 0
        %432 = vmatprep.subr.bf16.mxu0 0
        %433 = vmatpush1.bf16.msra.mxu0 0
        %434 = vmatprep.subr.bf16.mxu0 0
        %435 = vmatpush1.bf16.msra.mxu0 %v414
        %436 = vmatprep.subr.bf16.mxu0 0
        %437 = vmatpush1.bf16.msra.mxu0 %v413
        %438 = vmatprep.subr.bf16.mxu0 0
        %439 = vmatpush1.bf16.msra.mxu0 %v412
        %440 = vmatprep.subr.bf16.mxu0 0
        %441 = vmatpush1.bf16.msra.mxu0 %v411
        %442 = vmatprep.subr.bf16.mxu0 0
        %443 = vmatpush2.bf16.msra.mxu0 0
        %444 = vmatprep.subr.bf16.mxu0 0
        %445 = vmatpush2.bf16.msra.mxu0 0
        %446 = vmatprep.subr.bf16.mxu0 0
        %447 = vmatpush2.bf16.msra.mxu0 0
        %448 = vmatprep.subr.bf16.mxu0 0
        %449 = vmatpush2.bf16.msra.mxu0 0
        %450 = vmatprep.subr.bf16.mxu0 0
        %451 = vmatpush2.bf16.msra.mxu0 0
        %452 = vmatprep.subr.bf16.mxu0 0
        %453 = vmatpush2.bf16.msra.mxu0 0
        %454 = vmatprep.subr.bf16.mxu0 0
        %455 = vmatpush2.bf16.msra.mxu0 0
        %456 = vmatprep.subr.bf16.mxu0 0
        %457 = vmatpush2.bf16.msra.mxu0 0
        %458 = vmatprep.mubr.bf16.mxu0 0
        %459 = vmatmul.mubr.bf16.gmra.mxu0 %v421
        %v460 = vpop.f32.mrf.mxu0
        %v461 = vadd.f32 %v368, %v460
        %v462 = vpop.f32.mrf.mxu0
        %v463 = vpop.f32.mrf.mxu0
        %v464 = vadd.f32 %v373, %v463
        %v465 = vpop.f32.mrf.mxu0
        %466 = vmatprep.mubr.bf16.mxu0 0
        %467 = vmatmul.mubr.bf16.gmra.mxu0 %v424
        %v468 = vpop.f32.mrf.mxu0
        %v469 = vadd.f32 %v378, %v468
        %v470 = vpop.f32.mrf.mxu0
        %v471 = vpop.f32.mrf.mxu0
        %v472 = vadd.f32 %v383, %v471
        %v473 = vpop.f32.mrf.mxu0
        %474 = vdwg.mxu0
        %v475 = vxor.u32 %v461, 2147483648
        %v476 = vxor.u32 %v464, 2147483648
        %v477 = vxor.u32 %v469, 2147483648
        %v478 = vxor.u32 %v472, 2147483648
        %v479 = vmul.f32 %v475, 1.442695
        %v480 = vpow.pop %v479
        %v481 = vmul.f32 %v476, 1.442695
        %v482 = vpow.pop %v481
        %v483 = vmul.f32 %v477, 1.442695
        %v484 = vpow.pop %v483
        %v485 = vmul.f32 %v478, 1.442695
        %v486 = vpow.pop %v485
        %v487 = vadd.f32 %v480, 1.0
        %v488 = vadd.f32 %v482, 1.0
        %v489 = vadd.f32 %v484, 1.0
        %v490 = vadd.f32 %v486, 1.0
        %v491 = vrcp.pop %v487
        %v492 = vmul.f32 1.0, %v491
        %v493 = vrcp.pop %v488
        %v494 = vmul.f32 1.0, %v493
        %v495 = vrcp.pop %v489
        %v496 = vmul.f32 1.0, %v495
        %v497 = vrcp.pop %v490
        %v498 = vmul.f32 1.0, %v497
        %v499 = vmul.f32 %v461, %v492
        %v500 = vmul.f32 %v464, %v494
        %v501 = vmul.f32 %v469, %v496
        %v502 = vmul.f32 %v472, %v498
        %v503 = vpack.c.bf16 %v500, %v499
        %v504 = vpack.c.bf16 %v502, %v501
        %v505 = vld [vmem:[%s3] sm:$0xf]
        %v506 = vld [vmem:[%s3 + $0x4] sm:$0xf]
        %v507 = vld [vmem:[%s3 + $0x8] sm:$0xf]
        %v508 = vld [vmem:[%s3 + $0xc] sm:$0xf]
        %v509 = vld [vmem:[%s4] sm:$0xff]
        %v510 = vld [vmem:[%s4 + $0x8] sm:$0xff]
        %v511 = vld [vmem:[%s4 + $0x10] sm:$0xff]
        %v512 = vld [vmem:[%s4 + $0x18] sm:$0xff]
        %514 = vset.pattern.permute.xlu0 0
        %515 = vperm.xlu0 %514, %v509
        %v516 = vpop.permute.xlu0 %515
        %519 = vset.pattern.permute.xlu0 0
        %520 = vperm.xlu0 %519, %v510
        %v521 = vpop.permute.xlu0 %520
        %524 = vset.pattern.permute.xlu0 0
        %525 = vperm.xlu0 %524, %v511
        %v526 = vpop.permute.xlu0 %525
        %529 = vset.pattern.permute.xlu0 0
        %530 = vperm.xlu0 %529, %v512
        %v531 = vpop.permute.xlu0 %530
        %v537 = vunpack.c.l.b16 %v505
        %v538 = vunpack.c.l.b16 %v506
        %v539 = vunpack.c.l.b16 %v507
        %v540 = vunpack.c.l.b16 %v508
        %v541 = vpack.c.b16 %v538, %v537
        %v542 = vpack.c.b16 %v540, %v539
        %vm543 = vcmask 261120
        %v545 = vsel %vm543, %v541, 0
        %v548 = vsel %vm543, %v542, 0
        %550 = vmatprep.subr.bf16.mxu0 0
        %551 = vmatpush1.bf16.msra.mxu0 0
        %552 = vmatprep.subr.bf16.mxu0 0
        %553 = vmatpush1.bf16.msra.mxu0 0
        %554 = vmatprep.subr.bf16.mxu0 0
        %555 = vmatpush1.bf16.msra.mxu0 0
        %556 = vmatprep.subr.bf16.mxu0 0
        %557 = vmatpush1.bf16.msra.mxu0 0
        %558 = vmatprep.subr.bf16.mxu0 0
        %559 = vmatpush1.bf16.msra.mxu0 0
        %560 = vmatprep.subr.bf16.mxu0 0
        %561 = vmatpush1.bf16.msra.mxu0 0
        %562 = vmatprep.subr.bf16.mxu0 0
        %563 = vmatpush1.bf16.msra.mxu0 %v504
        %564 = vmatprep.subr.bf16.mxu0 0
        %565 = vmatpush1.bf16.msra.mxu0 %v503
        %566 = vmatprep.subr.bf16.mxu0 0
        %567 = vmatpush2.bf16.msra.mxu0 0
        %568 = vmatprep.subr.bf16.mxu0 0
        %569 = vmatpush2.bf16.msra.mxu0 0
        %570 = vmatprep.subr.bf16.mxu0 0
        %571 = vmatpush2.bf16.msra.mxu0 0
        %572 = vmatprep.subr.bf16.mxu0 0
        %573 = vmatpush2.bf16.msra.mxu0 0
        %574 = vmatprep.subr.bf16.mxu0 0
        %575 = vmatpush2.bf16.msra.mxu0 0
        %576 = vmatprep.subr.bf16.mxu0 0
        %577 = vmatpush2.bf16.msra.mxu0 0
        %578 = vmatprep.subr.bf16.mxu0 0
        %579 = vmatpush2.bf16.msra.mxu0 0
        %580 = vmatprep.subr.bf16.mxu0 0
        %581 = vmatpush2.bf16.msra.mxu0 0
        %582 = vmatprep.mubr.bf16.mxu0 0
        %583 = vmatmul.mubr.bf16.gmra.mxu0 %v545
        %v584 = vpop.f32.mrf.mxu0
        %v585 = vadd.f32 %v516, %v584
        %v586 = vpop.f32.mrf.mxu0
        %v587 = vpop.f32.mrf.mxu0
        %v588 = vadd.f32 %v521, %v587
        %v589 = vpop.f32.mrf.mxu0
        %590 = vmatprep.mubr.bf16.mxu0 0
        %591 = vmatmul.mubr.bf16.gmra.mxu0 %v548
        %v592 = vpop.f32.mrf.mxu0
        %v593 = vadd.f32 %v526, %v592
        %v594 = vpop.f32.mrf.mxu0
        %v595 = vpop.f32.mrf.mxu0
        %v596 = vadd.f32 %v531, %v595
        %v597 = vpop.f32.mrf.mxu0
        %598 = vdwg.mxu0
        %v599 = vxor.u32 %v585, 2147483648
        %v600 = vxor.u32 %v588, 2147483648
        %v601 = vxor.u32 %v593, 2147483648
        %v602 = vxor.u32 %v596, 2147483648
        %v603 = vmul.f32 %v599, 1.442695
        %v604 = vpow.pop %v603
        %v605 = vmul.f32 %v600, 1.442695
        %v606 = vpow.pop %v605
        %v607 = vmul.f32 %v601, 1.442695
        %v608 = vpow.pop %v607
        %v609 = vmul.f32 %v602, 1.442695
        %v610 = vpow.pop %v609
        %v611 = vadd.f32 %v604, 1.0
        %v612 = vadd.f32 %v606, 1.0
        %v613 = vadd.f32 %v608, 1.0
        %v614 = vadd.f32 %v610, 1.0
        %v615 = vrcp.pop %v611
        %v616 = vmul.f32 1.0, %v615
        %v617 = vrcp.pop %v612
        %v618 = vmul.f32 1.0, %v617
        %v619 = vrcp.pop %v613
        %v620 = vmul.f32 1.0, %v619
        %v621 = vrcp.pop %v614
        %v622 = vmul.f32 1.0, %v621
        %v623 = vmul.f32 %v585, %v616
        %v624 = vmul.f32 %v588, %v618
        %v625 = vmul.f32 %v593, %v620
        %v626 = vmul.f32 %v596, %v622
        %v627 = vpack.c.bf16 %v624, %v623
        %v628 = vpack.c.bf16 %v626, %v625
        %v629 = vld [vmem:[%s5] sm:$0xf]
        %v630 = vld [vmem:[%s5 + $0x4] sm:$0xf]
        %v631 = vld [vmem:[%s6] sm:$0xff]
        %v632 = vld [vmem:[%s6 + $0x8] sm:$0xff]
        %634 = vset.pattern.permute.xlu0 0
        %635 = vperm.xlu0 %634, %v631
        %v636 = vpop.permute.xlu0 %635
        %639 = vset.pattern.permute.xlu0 0
        %640 = vperm.xlu0 %639, %v632
        %v641 = vpop.permute.xlu0 %640
        %v645 = vunpack.c.l.b16 %v629
        %v646 = vunpack.c.l.b16 %v630
        %v647 = vpack.c.b16 %v646, %v645
        %v649 = vsel %vm543, %v647, 0
        %651 = vmatprep.subr.bf16.mxu0 0
        %652 = vmatpush1.bf16.msra.mxu0 0
        %653 = vmatprep.subr.bf16.mxu0 0
        %654 = vmatpush1.bf16.msra.mxu0 0
        %655 = vmatprep.subr.bf16.mxu0 0
        %656 = vmatpush1.bf16.msra.mxu0 0
        %657 = vmatprep.subr.bf16.mxu0 0
        %658 = vmatpush1.bf16.msra.mxu0 0
        %659 = vmatprep.subr.bf16.mxu0 0
        %660 = vmatpush1.bf16.msra.mxu0 0
        %661 = vmatprep.subr.bf16.mxu0 0
        %662 = vmatpush1.bf16.msra.mxu0 0
        %663 = vmatprep.subr.bf16.mxu0 0
        %664 = vmatpush1.bf16.msra.mxu0 %v628
        %665 = vmatprep.subr.bf16.mxu0 0
        %666 = vmatpush1.bf16.msra.mxu0 %v627
        %667 = vmatprep.subr.bf16.mxu0 0
        %668 = vmatpush2.bf16.msra.mxu0 0
        %669 = vmatprep.subr.bf16.mxu0 0
        %670 = vmatpush2.bf16.msra.mxu0 0
        %671 = vmatprep.subr.bf16.mxu0 0
        %672 = vmatpush2.bf16.msra.mxu0 0
        %673 = vmatprep.subr.bf16.mxu0 0
        %674 = vmatpush2.bf16.msra.mxu0 0
        %675 = vmatprep.subr.bf16.mxu0 0
        %676 = vmatpush2.bf16.msra.mxu0 0
        %677 = vmatprep.subr.bf16.mxu0 0
        %678 = vmatpush2.bf16.msra.mxu0 0
        %679 = vmatprep.subr.bf16.mxu0 0
        %680 = vmatpush2.bf16.msra.mxu0 0
        %681 = vmatprep.subr.bf16.mxu0 0
        %682 = vmatpush2.bf16.msra.mxu0 0
        %683 = vmatprep.mubr.bf16.mxu0 0
        %684 = vmatmul.mubr.bf16.gmra.mxu0 %v649
        %v685 = vpop.f32.mrf.mxu0
        %v686 = vadd.f32 %v636, %v685
        %v687 = vpop.f32.mrf.mxu0
        %v688 = vpop.f32.mrf.mxu0
        %v689 = vadd.f32 %v641, %v688
        %v690 = vpop.f32.mrf.mxu0
        %691 = vdwg.mxu0
        %692 = vst [vmem:[%s347] sm:$0xff] %v686
        %693 = vst [vmem:[%s347 + $0x8] sm:$0xff] %v689
        %s694 = sand.u32 %s181, 1
        %s695 = scalar_lea.sflag [#allocation4], %s694
        %s696 = sand.u32 %s181, 1
        %s697 = smul.addr %s696, 16
        %s698 = scalar_lea.vmem [#allocation3], %s697
        // Predicated region
        $region90: #{bio_mlp2d_forward.1} parent=84 // pred_check
          %p699 = pneg %p191
        $region91: #{bio_mlp2d_forward.1} parent=84 // pred_check_branch
          %701 = sbr.rel (%p699) target = $region93
        $region92: #{bio_mlp2d_forward.1} parent=84 // pred_region
          %s703 = ssub.s32 256, 256
          %704 = vsyncadd %s695, %s703
          %s705 = smul.addr %s21, 128
          %s706 = scalar_lea.hbm %s7, %s705
          %s707 = sshll.u32 %s698, 4
          %s708 = int_to_ptr.vmem [resolvable:$true] %s707
          %713 = dma.vmem_to_hbm [thread:$0]  %s708, 256, %s706, %s695, 128, 256, 8
        $region93: #{bio_mlp2d_forward.1} parent=84 // pred_fallthru
          _
      $region85: #{bio_mlp2d_forward.1} parent=5 // pred_fallthru
        _
      %p714 = scmp.le.s32.totalorder 2, %s16
      // Predicated region
      $region94: #{bio_mlp2d_forward.1} parent=5 // pred_check
        %p715 = pneg %p714
      $region95: #{bio_mlp2d_forward.1} parent=5 // pred_check_branch
        %717 = sbr.rel (%p715) target = $region97
      $region96: #{bio_mlp2d_forward.1} parent=5 // pred_region
        %s718 = ssub.s32 %s16, 2
        // Predicated region
        $region98: #{bio_mlp2d_forward.1} parent=96 // pred_check
          %p719 = pneg %p197
        $region99: #{bio_mlp2d_forward.1} parent=96 // pred_check_branch
          %721 = sbr.rel (%p719) target = $region101
        $region100: #{bio_mlp2d_forward.1} parent=96 // pred_region
          %s722 = sand.u32 %s182, 1
          %s723 = scalar_lea.sflag [#allocation4], %s722
          %s724 = sand.u32 %s182, 1
          %s725 = smul.addr %s724, 16
          %s726 = scalar_lea.vmem [#allocation3], %s725
          %727 = dma.done %s723, 256
        $region101: #{bio_mlp2d_forward.1} parent=96 // pred_fallthru
          _
      $region97: #{bio_mlp2d_forward.1} parent=5 // pred_fallthru
        _
    $region6: #{bio_mlp2d_forward.1} parent=1 // loop_footer
      %s20 = sadd.s32 1, %s16
    $region7: #{bio_mlp2d_forward.1} parent=1 // loop_footer_branch
      %15 = sbr.rel target = $region3
    $region8: #{bio_mlp2d_forward.1} parent=1 // loop_exit
      _
    %728 = vsyncpa [#allocation4], 1
    %s729 = scalar_lea.sflag [#allocation4], 1
    %730 = vsyncpa %s729, 1

</llo_original>
